<compile_context>
chip_gen: v5e
topology: v5e:2x2
jax: 0.10.0
libtpu: 0.0.40
codegen_flags: <defaults>
</compile_context>

<pallas_src>
import jax
import jax.numpy as jnp
from jax import lax
from jax.experimental import pallas as pl
from jax.experimental.pallas import tpu as pltpu


_LANE = 128
_SUBLANE = 8
_MAX_TB = 1024


def _round_up(x, m):
    return (x + m - 1) // m * m


# ---------------------------------------------------------------------------
# Per-generation tile / VMEM budget
# ---------------------------------------------------------------------------
def _hw_params():
    """Returns (per-input tile bytes, vmem_limit_bytes) tuned per TPU gen."""
    kind = ""
    try:
        kind = jax.devices()[0].device_kind.lower()
    except Exception:  # pragma: no cover - defensive; fall through to default
        pass
    if "v5 lite" in kind or "v5e" in kind or "v5litepod" in kind:
        # v5e: ~0.82 TB/s HBM -> 2 MiB tiles already amortize the ~0.35us
        # per-step overhead; scoped VMEM default is only 16 MiB so raise it.
        return 2 << 20, 32 << 20
    if "v6" in kind:
        # v6e: 128 MiB VMEM, ~1.4 TB/s -> larger tiles cut step overhead.
        return 6 << 20, 64 << 20
    if "v7" in kind or "tpu7" in kind:
        # v7x: only 64 MiB physical VMEM -> 6 MiB tiles (24 MiB double-
        # buffered across both inputs) plus headroom.
        return 6 << 20, 48 << 20
    # Unknown (v4 / v5p / interpret ...): conservative middle ground.
    return 4 << 20, 40 << 20


def _choose_tiles(B, F, itemsize, tile_bytes):
    """Pick (tb, tf) block dims for a (B, F) streaming reduction.

    Invariants:
      * tb is a multiple of 8, or equals B when B < 8 (full-dim block is legal)
      * tb <= B rounded down to a multiple of 8 when B >= 8, so blocks never
        start out of bounds (only the last block may extend past B)
      * tf is a multiple of 128, or equals F (full-dim block)
      * tb * tf * itemsize ~<= tile_bytes
      * when B >= 16, at least two blocks along the batch axis so the
        "parallel" grid dim can be sharded across v7x's two TensorCores.
    """
    tile_elems = max(tile_bytes // itemsize, _SUBLANE * _LANE)

    if B < _SUBLANE:
        tb_min = tb_cap = B
    else:
        tb_min = _SUBLANE
        tb_cap = (B // _SUBLANE) * _SUBLANE
        if B >= 2 * _SUBLANE:
            half = max(_SUBLANE,
                       (_round_up(B, _SUBLANE) // 2) // _SUBLANE * _SUBLANE)
            tb_cap = min(tb_cap, half)
        tb_cap = min(tb_cap, _MAX_TB)

    if F * tb_min <= tile_elems:
        # A (tb, F) slab fits the byte budget: full feature rows, no tail.
        tf = F
        tb = min(tb_cap, max(tb_min, (tile_elems // F) // _SUBLANE * _SUBLANE))
    else:
        # Wide rows: minimal batch rows per block, stream along features.
        tb = tb_min
        tf = max(_LANE, (tile_elems // tb) // _LANE * _LANE)
    return tb, tf


# ---------------------------------------------------------------------------
# Kernel
# ---------------------------------------------------------------------------
def _make_kernel(T, F, tf, scaling, compute_max):
    """Builds the streaming-reduction kernel, specialized on `compute_max`."""
    needs_tail_mask = (F % tf) != 0
    scale = float(scaling)

    def body(pred_ref, true_ref, sum_ref, max_ref):
        j = pl.program_id(1)  # reduction axis over the flattened C*T features

        @pl.when(j == 0)
        def _init():
            sum_ref[...] = jnp.zeros(sum_ref.shape, sum_ref.dtype)
            if compute_max:
                max_ref[...] = jnp.full(max_ref.shape, -jnp.inf, max_ref.dtype)

        p = pred_ref[...].astype(jnp.float32)
        t = true_ref[...].astype(jnp.float32)
        diff = jnp.abs(p - t)                                   # (tb, tf)

        # scaling * (T - time_index) coefficient generated in-kernel from an
        # iota over the global flattened feature index f = c*T + time.
        lane = lax.broadcasted_iota(jnp.int32, (1, tf), 1)
        f_idx = j * tf + lane                                   # (1, tf)
        t_idx = f_idx % T
        coeff = (jnp.float32(T) - t_idx.astype(jnp.float32)) * jnp.float32(scale)

        if needs_tail_mask:
            # Last feature tile extends past F: those lanes hold unspecified
            # values, so mask explicitly (|garbage| * 0 could still be NaN).
            valid = f_idx < F
            diff = jnp.where(valid, diff, jnp.float32(0.0))
            if compute_max:
                t = jnp.where(valid, t, -jnp.inf)

        sum_ref[...] += jnp.sum(diff * coeff, axis=1, keepdims=True)
        if compute_max:
            max_ref[...] = jnp.maximum(max_ref[...],
                                       jnp.max(t, axis=1, keepdims=True))

    if compute_max:
        def kernel(pred_ref, true_ref, sum_ref, max_ref):
            body(pred_ref, true_ref, sum_ref, max_ref)
    else:
        def kernel(pred_ref, true_ref, sum_ref):
            body(pred_ref, true_ref, sum_ref, None)
    return kernel


# ---------------------------------------------------------------------------
# Wrapper
# ---------------------------------------------------------------------------
def _per_batch_wasserstein(y_pred, y_true, scaling, compute_max,
                           tile_bytes_override=None):
    """Returns (per-batch scaled Wasserstein sums, per-batch max(y_true))."""
    B, C, T = y_pred.shape
    F = C * T
    itemsize = max(jnp.dtype(y_pred.dtype).itemsize,
                   jnp.dtype(y_true.dtype).itemsize)

    tile_bytes, vmem_limit = _hw_params()
    if tile_bytes_override is not None:
        tile_bytes = int(tile_bytes_override)

    tb, tf = _choose_tiles(B, F, itemsize, tile_bytes)
    grid_i = pl.cdiv(B, tb)
    grid_j = pl.cdiv(F, tf)
    b_out = grid_i * tb  # output allocated padded (cheap); sliced to B below

    # Free view: collapsing the two trailing contiguous dims is not a copy.
    pred2 = y_pred.reshape(B, F)
    true2 = y_true.reshape(B, F)

    kernel = _make_kernel(T, F, tf, scaling, compute_max)

    out_shapes = [jax.ShapeDtypeStruct((b_out, 1), jnp.float32)]
    out_specs = [pl.BlockSpec((tb, 1), lambda i, j: (i, 0))]
    if compute_max:
        out_shapes.append(jax.ShapeDtypeStruct((b_out, 1), jnp.float32))
        out_specs.append(pl.BlockSpec((tb, 1), lambda i, j: (i, 0)))

    outs = pl.pallas_call(
        kernel,
        out_shape=tuple(out_shapes),
        grid=(grid_i, grid_j),
        in_specs=[
            pl.BlockSpec((tb, tf), lambda i, j: (i, j)),    # pred
            pl.BlockSpec((tb, tf), lambda i, j: (i, j)),    # true
        ],
        out_specs=tuple(out_specs),
        compiler_params=pltpu.CompilerParams(
            dimension_semantics=("parallel", "arbitrary"),
            vmem_limit_bytes=vmem_limit),
    )(pred2, true2)

    sums = outs[0][:B, 0]
    maxes = outs[1][:B, 0] if compute_max else None
    return sums, maxes


def wasserstein_loss(y_pred, y_true, apply_scaling_factor=True, weight=None,
                     tile_bytes=None):
    """JAX/Pallas equivalent of WassersteinLoss.forward.

    `weight` and `apply_scaling_factor` must be static (Python) values — the
    PyTorch code's `if weight:` truthiness is reproduced at trace time.
    """
    if y_pred.ndim != 3 or y_true.ndim != 3:
        raise ValueError(
            'Input tensors must be 3-dimensional (batch_size, channels, window_size)')
    if y_pred.shape != y_true.shape:
        raise ValueError(
            f'Shape mismatch: y_pred shape {y_pred.shape} != y_true shape {y_true.shape}')

    B, C, T = y_pred.shape
    scaling = 2.0 / (T * C * (T + 1)) if apply_scaling_factor else 1.0
    use_weight = bool(weight)   # mirrors PyTorch `if weight:` (weight=0 -> unweighted)

    wass_2, true_max = _per_batch_wasserstein(
        y_pred, y_true, scaling, compute_max=use_weight,
        tile_bytes_override=tile_bytes)

    if use_weight:
        condition = true_max > 0          # fused in-kernel: no second HBM pass
        weights = jnp.where(condition, jnp.float32(weight), jnp.float32(1.0))
        return jnp.sum(wass_2 * weights) / jnp.sum(weights)
    return jnp.mean(wass_2)


# ---------------------------------------------------------------------------
# Pure-JAX reference (direct transcription of the PyTorch code) for checking
# ---------------------------------------------------------------------------
def _reference(y_pred, y_true, apply_scaling_factor=True, weight=None):
    y_pred = y_pred.astype(jnp.float32)
    y_true = y_true.astype(jnp.float32)
    B, C, T = y_pred.shape
    abs_diff = jnp.abs(y_pred - y_true)                       # (B, C, T)
    mask = jnp.triu(jnp.ones((T, T), jnp.float32))            # (T, T)
    abs_diff_t = jnp.transpose(abs_diff, (0, 2, 1))           # (B, T, C)
    masked = abs_diff_t[:, :, None, :] * mask[None, :, :, None]
    ch = masked.sum(axis=2).sum(axis=1)                       # (B, C)
    scaling = (2.0 / (T * C * (T + 1))) if apply_scaling_factor else 1.0
    wass_2 = scaling * ch.sum(axis=1)                         # (B,)
    if weight:
        condition = jnp.any(y_true.reshape(B, -1) > 0, axis=-1)
        weights = jnp.where(condition, jnp.float32(weight), jnp.float32(1.0))
        return jnp.sum(wass_2 * weights) / jnp.sum(weights)
    return jnp.mean(wass_2)


if __name__ == "__main__":
    key = jax.random.PRNGKey(0)
    k1, k2 = jax.random.split(key)
    B, C, T = 2, 4, 16
    y_pred = jax.random.normal(k1, (B, C, T), dtype=jnp.float32)
    y_true = jax.random.normal(k2, (B, C, T), dtype=jnp.float32)
    # Make the second batch item anomaly-free to exercise the weighted path.
    y_true = y_true.at[1].set(-jnp.abs(y_true[1]))

    loss_fn = jax.jit(
        wasserstein_loss,
        static_argnames=("apply_scaling_factor", "weight", "tile_bytes"))

    # Unweighted path (no max output / no extra XLU work).
    loss = jax.block_until_ready(
        loss_fn(y_pred, y_true, apply_scaling_factor=True))
    ref = _reference(y_pred, y_true, apply_scaling_factor=True)
    assert jnp.allclose(loss, ref, rtol=1e-5, atol=1e-5), (loss, ref)

    # Weighted path (anomaly condition fused into the kernel).
    loss_w = jax.block_until_ready(
        loss_fn(y_pred, y_true, apply_scaling_factor=True, weight=5))
    ref_w = _reference(y_pred, y_true, apply_scaling_factor=True, weight=5)
    assert jnp.allclose(loss_w, ref_w, rtol=1e-5, atol=1e-5), (loss_w, ref_w)

    # Ragged batch (B < 8, not a multiple of the sublane) + forced feature
    # tiling with a non-dividing tail tile: exercises the partial-block path
    # and the in-kernel tail mask, using a deliberately tiny tile budget.
    B2, C2, T2 = 5, 3, 100        # F = 300 > 256-lane tile -> 2 feature tiles
    yp2 = jax.random.normal(jax.random.PRNGKey(1), (B2, C2, T2), jnp.float32)
    yt2 = jax.random.normal(jax.random.PRNGKey(2), (B2, C2, T2), jnp.float32)
    yt2 = yt2.at[2].set(-jnp.abs(yt2[2]))     # one anomaly-free sample
    loss2 = jax.block_until_ready(
        loss_fn(yp2, yt2, apply_scaling_factor=True, weight=3,
                tile_bytes=8 * 1024))
    ref2 = _reference(yp2, yt2, apply_scaling_factor=True, weight=3)
    assert jnp.allclose(loss2, ref2, rtol=1e-5, atol=1e-5), (loss2, ref2)

    # Same ragged shape, unweighted, default (per-generation) tiling.
    loss3 = jax.block_until_ready(
        loss_fn(yp2, yt2, apply_scaling_factor=True))
    ref3 = _reference(yp2, yt2, apply_scaling_factor=True)
    assert jnp.allclose(loss3, ref3, rtol=1e-5, atol=1e-5), (loss3, ref3)

    print("KERNEL_OK")
</pallas_src>

<mosaic_0001>
module attributes {stable_mosaic.version = 11 : i64} {
  func.func @kernel(%arg0: i32, %arg1: i32, %arg2: memref<2x64xf32, #tpu.memory_space<vmem>>, %arg3: memref<2x64xf32, #tpu.memory_space<vmem>>, %arg4: memref<2x1xf32, #tpu.memory_space<vmem>>) attributes {dimension_semantics = [#tpu.dimension_semantics<parallel>, #tpu.dimension_semantics<arbitrary>], iteration_bounds = array<i64: 1, 1>, scalar_prefetch = 0 : i64, scratch_operands = 0 : i64, tpu.core_type = #tpu.core_type<tc>, window_params = [{transform_indices = @transform_0, window_bounds = array<i64: 2, 64>}, {transform_indices = @transform_1, window_bounds = array<i64: 2, 64>}, {transform_indices = @transform_2, window_bounds = array<i64: 2, 1>}]} {
    %c0_i32 = arith.constant 0 : i32
    %0 = arith.cmpi eq, %arg1, %c0_i32 : i32
    %1 = arith.extui %0 : i1 to i32
    %c0_i32_0 = arith.constant 0 : i32
    %2 = arith.cmpi ne, %1, %c0_i32_0 : i32
    scf.if %2 {
      %cst_14 = arith.constant 0.000000e+00 : f32
      %39 = vector.broadcast %cst_14 : f32 to vector<2x1xf32>
      %c0_15 = arith.constant 0 : index
      %c0_16 = arith.constant 0 : index
      %40 = vector.load %arg4[%c0_15, %c0_16] : memref<2x1xf32, #tpu.memory_space<vmem>>, vector<2x1xf32>
      tpu.vector_store %arg4[%c0_15, %c0_16], %39 {strides = array<i32>} : memref<2x1xf32, #tpu.memory_space<vmem>>, vector<2x1xf32>,
    } else {
    }
    %c0 = arith.constant 0 : index
    %c0_1 = arith.constant 0 : index
    %3 = vector.load %arg2[%c0, %c0_1] : memref<2x64xf32, #tpu.memory_space<vmem>>, vector<2x64xf32>
    %c0_2 = arith.constant 0 : index
    %c0_3 = arith.constant 0 : index
    %4 = vector.load %arg3[%c0_2, %c0_3] : memref<2x64xf32, #tpu.memory_space<vmem>>, vector<2x64xf32>
    %5 = arith.subf %3, %4 : vector<2x64xf32>
    %6 = math.absf %5 : vector<2x64xf32>
    %7 = tpu.iota {dimensions = array<i32: 1>} : vector<1x64xi32>
    %c64_i32 = arith.constant 64 : i32
    %8 = arith.muli %arg1, %c64_i32 : i32
    %9 = vector.broadcast %8 : i32 to vector<1x64xi32>
    %10 = arith.addi %9, %7 : vector<1x64xi32>
    %c16_i32 = arith.constant 16 : i32
    %c0_i32_4 = arith.constant 0 : i32
    %11 = arith.cmpi eq, %c16_i32, %c0_i32_4 : i32
    %c1_i32 = arith.constant 1 : i32
    %12 = arith.select %11, %c1_i32, %c16_i32 : i32
    %13 = vector.broadcast %12 : i32 to vector<1x64xi32>
    %14 = arith.remsi %10, %13 : vector<1x64xi32>
    %c0_i32_5 = arith.constant 0 : i32
    %15 = vector.broadcast %c0_i32_5 : i32 to vector<1x64xi32>
    %16 = arith.cmpi ne, %14, %15 : vector<1x64xi32>
    %c0_i32_6 = arith.constant 0 : i32
    %17 = vector.broadcast %c0_i32_6 : i32 to vector<1x64xi32>
    %18 = arith.cmpi slt, %14, %17 : vector<1x64xi32>
    %c0_i32_7 = arith.constant 0 : i32
    %19 = arith.cmpi slt, %12, %c0_i32_7 : i32
    %20 = vector.broadcast %19 : i1 to vector<1x64xi1>
    %21 = vector.broadcast %20 : vector<1x64xi1> to vector<1x64xi1>
    %22 = arith.xori %18, %21 : vector<1x64xi1>
    %23 = arith.andi %22, %16 : vector<1x64xi1>
    %24 = vector.broadcast %12 : i32 to vector<1x64xi32>
    %25 = arith.addi %14, %24 : vector<1x64xi32>
    %26 = arith.select %23, %25, %14 : vector<1x64xi1>, vector<1x64xi32>
    %27 = arith.sitofp %26 : vector<1x64xi32> to vector<1x64xf32>
    %cst = arith.constant 1.600000e+01 : f32
    %28 = vector.broadcast %cst : f32 to vector<1x64xf32>
    %29 = arith.subf %28, %27 : vector<1x64xf32>
    %cst_8 = arith.constant 0.0018382353 : f32
    %30 = vector.broadcast %cst_8 : f32 to vector<1x64xf32>
    %31 = arith.mulf %29, %30 : vector<1x64xf32>
    %c0_9 = arith.constant 0 : index
    %c0_10 = arith.constant 0 : index
    %32 = vector.load %arg4[%c0_9, %c0_10] : memref<2x1xf32, #tpu.memory_space<vmem>>, vector<2x1xf32>
    %33 = vector.broadcast %31 : vector<1x64xf32> to vector<2x64xf32>
    %34 = arith.mulf %6, %33 : vector<2x64xf32>
    %cst_11 = arith.constant dense<0.000000e+00> : vector<2xf32>
    %35 = vector.multi_reduction <add>, %34, %cst_11 [1] : vector<2x64xf32> to vector<2xf32>
    %36 = vector.shape_cast %35 : vector<2xf32> to vector<2x1xf32>
    %37 = arith.addf %32, %36 : vector<2x1xf32>
    %c0_12 = arith.constant 0 : index
    %c0_13 = arith.constant 0 : index
    %38 = vector.load %arg4[%c0_12, %c0_13] : memref<2x1xf32, #tpu.memory_space<vmem>>, vector<2x1xf32>
    tpu.vector_store %arg4[%c0_12, %c0_13], %37 {strides = array<i32>} : memref<2x1xf32, #tpu.memory_space<vmem>>, vector<2x1xf32>,
    return
  }
  func.func @transform_0(%arg0: i32, %arg1: i32) -> (i32, i32) {
    %c0_i32 = arith.constant 0 : i32
    return %arg0, %arg1 : i32, i32
  }
  func.func @transform_1(%arg0: i32, %arg1: i32) -> (i32, i32) {
    %c0_i32 = arith.constant 0 : i32
    return %arg0, %arg1 : i32, i32
  }
  func.func @transform_2(%arg0: i32, %arg1: i32) -> (i32, i32) {
    %c0_i32 = arith.constant 0 : i32
    %c0_i32_0 = arith.constant 0 : i32
    return %arg0, %c0_i32 : i32, i32
  }
}

</mosaic_0001>

<llo_original>
// kernel: wasserstein_loss.1
$region0: #{wasserstein_loss.1}
  #allocation0 [shape = 'u32[]', space=smem, size = 0x4, offset = 0x4, fixed_abs, tag = 'smem constant byte address 0x4 - core index']
  #allocation1 [shape = 'u32[72,128]{1,0:T(1,128)}', space=vmem, size = 0x9000, scoped, tag = 'internal scratch']
  %s0 = inlined_call_operand.vmem [shape: f32[2,64], index: 0, kind: input, shape index: {}]
  %s1 = inlined_call_operand.vmem [shape: f32[2,64], index: 1, kind: input, shape index: {}]
  %s2 = inlined_call_operand.vmem [shape: f32[2,1], index: 2, kind: output, shape index: {}]
  %s3 = sld [smem:[#allocation0]]
  $region22: #{wasserstein_loss.1} parent=0
    _
  %s5 = ssub.s32 1, %s3
  %s6 = scalar_select 0, %s5, %s3
  // Predicated region
  $region2: #{wasserstein_loss.1} parent=0 // pred_check
    _
  $region3: #{wasserstein_loss.1} parent=0 // pred_check_branch
    %8 = sbr.rel (0) target = $region5
  $region4: #{wasserstein_loss.1} parent=0 // pred_region
    _
  $region5: #{wasserstein_loss.1} parent=0 // pred_fallthru
    _
  // Predicated region
  $region6: #{wasserstein_loss.1} parent=0 // pred_check
    _
  $region7: #{wasserstein_loss.1} parent=0 // pred_check_branch
    %10 = sbr.rel (0) target = $region9
  $region8: #{wasserstein_loss.1} parent=0 // pred_region
    _
  $region9: #{wasserstein_loss.1} parent=0 // pred_fallthru
    _
  %p11 = scmp.eq.s32.totalorder 0, 0
  // Predicated region
  $region10: #{wasserstein_loss.1} parent=0 // pred_check
    %p12 = pneg %p11
  $region11: #{wasserstein_loss.1} parent=0 // pred_check_branch
    %14 = sbr.rel (%p12) target = $region13
  $region12: #{wasserstein_loss.1} parent=0 // pred_region
    %vm15 = vcmask 1024
    %16 = vst.msk [vmem:[%s2] sm:$0x3] %vm15, 0.0
  $region13: #{wasserstein_loss.1} parent=0 // pred_fallthru
    _
  %v17 = vld [vmem:[%s0] sm:$0x3]
  %v18 = vld [vmem:[%s1] sm:$0x3]
  %v19 = vsub.f32 %v17, %v18
  %v20 = vand.u32 2147483647, %v19
  %v21 = vlaneseq
  %v22 = vand.u32 %v21, 127
  %s23 = smul.u32 0, 64
  %v24 = vstv %s23
  %v25 = vadd.s32 %v24, %v22
  %vm26 = vcmp.lt.s32.totalorder %v25, 0
  %v27 = vsub.s32 0, %v25
  %v28 = vsel %vm26, %v27, %v25
  %v29 = vshrl.u32 %v28, 4
  %v30 = vand.u32 %v28, 15
  %v31 = vsub.s32 0, %v30
  %v32 = vsel %vm26, %v31, %v30
  %vm33 = vcmp.ne.s32.totalorder %v32, 0
  %vm34 = vcmp.lt.s32.totalorder %v32, 0
  %vm35 = vmand %vm34, %vm33
  %v36 = vadd.s32 %v32, 16
  %v37 = vsel %vm35, %v36, %v32
  %v38 = vcvt.s32.f32 %v37
  %v39 = vsub.f32 16.0, %v38
  %v40 = vmul.f32 %v39, 0.0018382353
  %v41 = vld [vmem:[%s2] sm:$0x3]
  %v42 = vmul.f32 %v20, %v40
  %vm43 = vcmask 517120
  %v44 = vsel %vm43, %v42, 0.0
  %45 = vadd.xlane.f32.xlu0 %v44
  %v46 = vpop.xlane.xlu0 %45
  %v47 = vadd.f32 %v41, %v46
  %vm48 = vcmask 1024
  %49 = vst.msk [vmem:[%s2] sm:$0x3] %vm48, %v47
  // Predicated region
  $region14: #{wasserstein_loss.1} parent=0 // pred_check
    _
  $region15: #{wasserstein_loss.1} parent=0 // pred_check_branch
    %51 = sbr.rel (0) target = $region17
  $region16: #{wasserstein_loss.1} parent=0 // pred_region
    _
  $region17: #{wasserstein_loss.1} parent=0 // pred_fallthru
    _
  // Predicated region
  $region18: #{wasserstein_loss.1} parent=0 // pred_check
    _
  $region19: #{wasserstein_loss.1} parent=0 // pred_check_branch
    %53 = sbr.rel (0) target = $region21
  $region20: #{wasserstein_loss.1} parent=0 // pred_region
    _
  $region21: #{wasserstein_loss.1} parent=0 // pred_fallthru
    _

</llo_original>
